<compile_context>
chip_gen: v7x
topology: tpu7x:2x2x1
jax: 0.10.0
libtpu: 0.0.40
codegen_flags: <defaults>
</compile_context>

<pallas_src>
import functools

import jax
import jax.numpy as jnp
from jax import lax
from jax.experimental import pallas as pl
from jax.experimental.pallas import tpu as pltpu


def _focal_kernel(logits_ref, tgt_ref, out_ref, acc_ref, *, alpha, gamma, n_total):
    # logits_ref: (TILE_N, C) native dtype, VMEM (one batch tile)
    # tgt_ref:    (TILE_N, 1) int32, VMEM
    # out_ref:    (1, 1) float32, VMEM (same block every grid step -> resident)
    # acc_ref:    (1, 1) float32, VMEM scratch (running sum of per-row NLL)
    i = pl.program_id(0)

    @pl.when(i == 0)
    def _init():
        acc_ref[...] = jnp.zeros_like(acc_ref)

    x = logits_ref[...].astype(jnp.float32)          # (tile_n, C)
    t = tgt_ref[...]                                 # (tile_n, 1)
    tile_n, c = x.shape

    # Row-wise stable log-sum-exp; reuse the shifted tile (x - m) for the target
    # gather so the +m / -m cancel:  nll = lse - x[t] = log(sum e^(x-m)) - (x[t]-m)
    m = jnp.max(x, axis=1, keepdims=True)            # (tile_n, 1)
    xs = x - m
    sum_e = jnp.sum(jnp.exp(xs), axis=1, keepdims=True)

    cls_idx = lax.broadcasted_iota(jnp.int32, (tile_n, c), 1)
    tgt_shift = jnp.sum(jnp.where(cls_idx == t, xs, 0.0), axis=1, keepdims=True)

    nll = jnp.log(sum_e) - tgt_shift                 # (tile_n, 1)

    # Mask ragged rows of the last tile (block may extend past N; contents there
    # are unspecified, so select them out before reducing).
    row_ids = i * tile_n + lax.broadcasted_iota(jnp.int32, (tile_n, 1), 0)
    nll = jnp.where(row_ids < n_total, nll, 0.0)

    acc_ref[...] += jnp.sum(nll, axis=0, keepdims=True)   # (1, 1)

    @pl.when(i == pl.num_programs(0) - 1)
    def _finalize():
        ce = acc_ref[...] * jnp.float32(1.0 / n_total)     # (1, 1) mean NLL
        pt = jnp.exp(-ce)
        one_minus_pt = 1.0 - pt
        if float(gamma) == int(gamma) and gamma >= 0:
            mod = jnp.ones_like(one_minus_pt)
            for _ in range(int(gamma)):                    # gamma=2 -> square, no pow
                mod = mod * one_minus_pt
        else:
            mod = one_minus_pt ** jnp.float32(gamma)
        out_ref[...] = jnp.float32(alpha) * mod * ce


def multi_focal_loss(logits, targets, *, alpha=0.25, gamma=2.0):
    """logits: [N, C] float (any dtype); targets: [N] int class indices. Returns scalar f32."""
    n, c = logits.shape
    itemsize = jnp.dtype(logits.dtype).itemsize

    # Largest batch tile that keeps one logits buffer under ~4 MiB (8 MiB when
    # double-buffered) -> comfortably inside the scoped-VMEM default on all gens.
    budget_rows = max(8, (4 * 1024 * 1024) // max(1, c * itemsize))
    budget_rows = max(8, (budget_rows // 8) * 8)
    if n >= 8:
        tile_n = min(budget_rows, (n // 8) * 8, 4096)
    else:
        tile_n = n  # full extent: second-minor dim equals the array dim

    grid = (pl.cdiv(n, tile_n),)
    tgt2d = targets.astype(jnp.int32).reshape(n, 1)

    out = pl.pallas_call(
        functools.partial(
            _focal_kernel, alpha=float(alpha), gamma=float(gamma), n_total=n
        ),
        out_shape=jax.ShapeDtypeStruct((1, 1), jnp.float32),
        grid_spec=pltpu.PrefetchScalarGridSpec(
            num_scalar_prefetch=0,
            grid=grid,
            in_specs=[
                pl.BlockSpec((tile_n, c), lambda i: (i, 0)),
                pl.BlockSpec((tile_n, 1), lambda i: (i, 0)),
            ],
            out_specs=pl.BlockSpec((1, 1), lambda i: (0, 0)),
            scratch_shapes=[pltpu.VMEM((1, 1), jnp.float32)],
        ),
        compiler_params=pltpu.CompilerParams(
            dimension_semantics=("arbitrary",),   # batch axis is a reduction
        ),
    )(logits, tgt2d)   # native dtype: no f32 up-cast in HBM
    return out[0, 0]


def _reference(logits, targets, alpha=0.25, gamma=2.0):
    # Plain-JAX reference for sanity checking.
    logp = jax.nn.log_softmax(logits.astype(jnp.float32), axis=-1)
    nll = -jnp.take_along_axis(logp, targets[:, None].astype(jnp.int32), axis=-1)[:, 0]
    ce = jnp.mean(nll)
    pt = jnp.exp(-ce)
    return alpha * (1.0 - pt) ** gamma * ce


if __name__ == "__main__":
    key = jax.random.PRNGKey(0)
    k1, k2 = jax.random.split(key)

    # batch=12 (not a multiple of the 8-row tile -> exercises the multi-step grid
    # and the ragged-row mask), num_classes=32.
    N, C = 12, 32
    logits = jax.random.normal(k1, (N, C), dtype=jnp.float32)
    targets = jax.random.randint(k2, (N,), 0, C, dtype=jnp.int32)

    out = multi_focal_loss(logits, targets, alpha=0.25, gamma=2.0)
    out = jax.block_until_ready(out)

    ref = _reference(logits, targets, alpha=0.25, gamma=2.0)
    assert jnp.allclose(out, ref, rtol=1e-5, atol=1e-5), (out, ref)

    print("KERNEL_OK")
</pallas_src>

<mosaic_0001>
module attributes {stable_mosaic.version = 11 : i64} {
  func.func @_focal_kernel(%arg0: i32, %arg1: memref<8x32xf32, #tpu.memory_space<vmem>>, %arg2: memref<8x1xi32, #tpu.memory_space<vmem>>, %arg3: memref<1x1xf32, #tpu.memory_space<vmem>>, %arg4: memref<1x1xf32, #tpu.memory_space<vmem>>) attributes {dimension_semantics = [#tpu.dimension_semantics<arbitrary>], iteration_bounds = array<i64: 2>, scalar_prefetch = 0 : i64, scratch_operands = 1 : i64, tpu.core_type = #tpu.core_type<tc>, window_params = [{transform_indices = @transform_0, window_bounds = array<i64: 8, 32>}, {transform_indices = @transform_1, window_bounds = array<i64: 8, 1>}, {pipeline_mode = #tpu.pipeline_mode<synchronous>, transform_indices = @transform_2, window_bounds = array<i64: 1, 1>}]} {
    %c0_i32 = arith.constant 0 : i32
    %0 = arith.cmpi eq, %arg0, %c0_i32 : i32
    %1 = arith.extui %0 : i1 to i32
    %c0_i32_0 = arith.constant 0 : i32
    %2 = arith.cmpi ne, %1, %c0_i32_0 : i32
    scf.if %2 {
      %cst_14 = arith.constant 0.000000e+00 : f32
      %37 = vector.broadcast %cst_14 : f32 to vector<1x1xf32>
      %c0_15 = arith.constant 0 : index
      %c0_16 = arith.constant 0 : index
      %38 = vector.load %arg4[%c0_15, %c0_16] : memref<1x1xf32, #tpu.memory_space<vmem>>, vector<1x1xf32>
      tpu.vector_store %arg4[%c0_15, %c0_16], %37 {strides = array<i32>} : memref<1x1xf32, #tpu.memory_space<vmem>>, vector<1x1xf32>,
    } else {
    }
    %c0 = arith.constant 0 : index
    %c0_1 = arith.constant 0 : index
    %3 = vector.load %arg1[%c0, %c0_1] : memref<8x32xf32, #tpu.memory_space<vmem>>, vector<8x32xf32>
    %c0_2 = arith.constant 0 : index
    %c0_3 = arith.constant 0 : index
    %4 = vector.load %arg2[%c0_2, %c0_3] : memref<8x1xi32, #tpu.memory_space<vmem>>, vector<8x1xi32>
    %cst = arith.constant dense<0xFF800000> : vector<8xf32>
    %5 = vector.multi_reduction <maximumf>, %3, %cst [1] : vector<8x32xf32> to vector<8xf32>
    %6 = vector.shape_cast %5 : vector<8xf32> to vector<8x1xf32>
    %7 = vector.broadcast %6 : vector<8x1xf32> to vector<8x32xf32>
    %8 = arith.subf %3, %7 : vector<8x32xf32>
    %9 = math.exp %8 : vector<8x32xf32>
    %cst_4 = arith.constant dense<0.000000e+00> : vector<8xf32>
    %10 = vector.multi_reduction <add>, %9, %cst_4 [1] : vector<8x32xf32> to vector<8xf32>
    %11 = vector.shape_cast %10 : vector<8xf32> to vector<8x1xf32>
    %12 = tpu.iota {dimensions = array<i32: 1>} : vector<8x32xi32>
    %13 = vector.broadcast %4 : vector<8x1xi32> to vector<8x32xi32>
    %14 = arith.cmpi eq, %12, %13 : vector<8x32xi32>
    %cst_5 = arith.constant 0.000000e+00 : f32
    %15 = vector.broadcast %cst_5 : f32 to vector<8x32xf32>
    %16 = arith.select %14, %8, %15 : vector<8x32xi1>, vector<8x32xf32>
    %cst_6 = arith.constant dense<0.000000e+00> : vector<8xf32>
    %17 = vector.multi_reduction <add>, %16, %cst_6 [1] : vector<8x32xf32> to vector<8xf32>
    %18 = vector.shape_cast %17 : vector<8xf32> to vector<8x1xf32>
    %19 = math.log %11 : vector<8x1xf32>
    %20 = arith.subf %19, %18 : vector<8x1xf32>
    %c8_i32 = arith.constant 8 : i32
    %21 = arith.muli %arg0, %c8_i32 : i32
    %22 = tpu.iota {dimensions = array<i32: 0>} : vector<8x1xi32>
    %23 = vector.broadcast %21 : i32 to vector<8x1xi32>
    %24 = arith.addi %23, %22 : vector<8x1xi32>
    %c12_i32 = arith.constant 12 : i32
    %25 = vector.broadcast %c12_i32 : i32 to vector<8x1xi32>
    %26 = arith.cmpi slt, %24, %25 : vector<8x1xi32>
    %cst_7 = arith.constant 0.000000e+00 : f32
    %27 = vector.broadcast %cst_7 : f32 to vector<8x1xf32>
    %28 = arith.select %26, %20, %27 : vector<8x1xi1>, vector<8x1xf32>
    %c0_8 = arith.constant 0 : index
    %c0_9 = arith.constant 0 : index
    %29 = vector.load %arg4[%c0_8, %c0_9] : memref<1x1xf32, #tpu.memory_space<vmem>>, vector<1x1xf32>
    %cst_10 = arith.constant dense<0.000000e+00> : vector<1xf32>
    %30 = vector.multi_reduction <add>, %28, %cst_10 [0] : vector<8x1xf32> to vector<1xf32>
    %31 = vector.shape_cast %30 : vector<1xf32> to vector<1x1xf32>
    %32 = arith.addf %29, %31 : vector<1x1xf32>
    %c0_11 = arith.constant 0 : index
    %c0_12 = arith.constant 0 : index
    %33 = vector.load %arg4[%c0_11, %c0_12] : memref<1x1xf32, #tpu.memory_space<vmem>>, vector<1x1xf32>
    tpu.vector_store %arg4[%c0_11, %c0_12], %32 {strides = array<i32>} : memref<1x1xf32, #tpu.memory_space<vmem>>, vector<1x1xf32>,
    %c1_i32 = arith.constant 1 : i32
    %34 = arith.cmpi eq, %arg0, %c1_i32 : i32
    %35 = arith.extui %34 : i1 to i32
    %c0_i32_13 = arith.constant 0 : i32
    %36 = arith.cmpi ne, %35, %c0_i32_13 : i32
    scf.if %36 {
      %c0_14 = arith.constant 0 : index
      %c0_15 = arith.constant 0 : index
      %37 = vector.load %arg4[%c0_14, %c0_15] : memref<1x1xf32, #tpu.memory_space<vmem>>, vector<1x1xf32>
      %cst_16 = arith.constant 0.0833333358 : f32
      %38 = vector.broadcast %cst_16 : f32 to vector<1x1xf32>
      %39 = arith.mulf %37, %38 : vector<1x1xf32>
      %cst_17 = arith.constant 0.000000e+00 : f32
      %40 = vector.broadcast %cst_17 : f32 to vector<1x1xf32>
      %41 = arith.subf %40, %39 : vector<1x1xf32>
      %42 = math.exp %41 : vector<1x1xf32>
      %cst_18 = arith.constant 1.000000e+00 : f32
      %43 = vector.broadcast %cst_18 : f32 to vector<1x1xf32>
      %44 = arith.subf %43, %42 : vector<1x1xf32>
      %cst_19 = arith.constant 1.000000e+00 : f32
      %45 = vector.broadcast %cst_19 : f32 to vector<1x1xf32>
      %46 = arith.mulf %45, %44 : vector<1x1xf32>
      %47 = arith.mulf %46, %44 : vector<1x1xf32>
      %cst_20 = arith.constant 2.500000e-01 : f32
      %48 = vector.broadcast %cst_20 : f32 to vector<1x1xf32>
      %49 = arith.mulf %48, %47 : vector<1x1xf32>
      %50 = arith.mulf %49, %39 : vector<1x1xf32>
      %c0_21 = arith.constant 0 : index
      %c0_22 = arith.constant 0 : index
      %51 = vector.load %arg3[%c0_21, %c0_22] : memref<1x1xf32, #tpu.memory_space<vmem>>, vector<1x1xf32>
      tpu.vector_store %arg3[%c0_21, %c0_22], %50 {strides = array<i32>} : memref<1x1xf32, #tpu.memory_space<vmem>>, vector<1x1xf32>,
    } else {
    }
    return
  }
  func.func @transform_0(%arg0: i32) -> (i32, i32) {
    %c0_i32 = arith.constant 0 : i32
    %c0_i32_0 = arith.constant 0 : i32
    return %arg0, %c0_i32 : i32, i32
  }
  func.func @transform_1(%arg0: i32) -> (i32, i32) {
    %c0_i32 = arith.constant 0 : i32
    %c0_i32_0 = arith.constant 0 : i32
    return %arg0, %c0_i32 : i32, i32
  }
  func.func @transform_2(%arg0: i32) -> (i32, i32) {
    %c0_i32 = arith.constant 0 : i32
    %c0_i32_0 = arith.constant 0 : i32
    %c0_i32_1 = arith.constant 0 : i32
    return %c0_i32, %c0_i32_0 : i32, i32
  }
}

</mosaic_0001>

<llo_original>
// kernel: tpu_custom_call.1
$region0: #{tpu_custom_call.1}
  #allocation0 [shape = 'u32[]', space=smem, size = 0x4, offset = 0x4, fixed_abs, tag = 'smem constant byte address 0x4 - core index']
  #allocation1 [shape = 'u32[144,128]{1,0:T(1,128)}', space=vmem, size = 0x12000, scoped, tag = 'internal scratch']
  #allocation2 [shape = 'f32[1,1]{1,0:T(1,128)}', space=vmem, size = 0x200, scoped, tag = 'scratch operand']
  %s0 = inlined_call_operand.vmem [shape: f32[12,32], index: 0, kind: input, shape index: {}]
  %s1 = inlined_call_operand.vmem [shape: s32[12,1], index: 1, kind: input, shape index: {}]
  %s2 = inlined_call_operand.hbm [shape: f32[1,1], index: 2, kind: output, shape index: {}]
  %s3 = sld [smem:[#allocation0]]
  $region49: #{tpu_custom_call.1} parent=0
    _
  %s5 = ssub.s32 1, %s3
  %s6 = scalar_select 0, %s5, %s3
  $region1: #{tpu_custom_call.1} parent=0
    #allocation3 [shape = 'u8[512]{0}', space=vmem, size = 0x400, scoped, tag = 'output window, operand 0, single buffered']
    #allocation4 [shape = 's32[2]{0}', space=sflag, size = 0x8, scoped, tag = 'scoped memory for tpu_custom_call.1']
    %7 = vsyncpa [#allocation4], 0
    loop: start=0, step=1, limit=4
    $region2: #{tpu_custom_call.1} parent=1 // loop_pre_header
      _
    $region3: #{tpu_custom_call.1} parent=1 // loop_header
      %s9 = sphi 0, %s13
      %p10 = scmp.ge.s32.totalorder %s9, 4
      %s19 = sphi 0, %s21
      %s22 = sphi 0, %s19
      %s23 = sphi 0, %s22
      %s39 = sphi 0, %s23
      %s45 = sphi 0, %s47
      %s48 = sphi 0, %s45
      %s49 = sphi 0, %s48
      %s65 = sphi 0, %s49
      %s69 = sphi 0, %s69
      %s71 = sphi 0, %s69
      %s72 = sphi 0, %s71
      %s86 = sphi 0, %s72
    $region4: #{tpu_custom_call.1} parent=1 // loop_header_branch
      %12 = sbr.rel (%p10) target = $region8
    $region5: #{tpu_custom_call.1} parent=1 // loop_body
      %s14 = ssub.s32 %s9, 1
      %s15 = ssub.s32 %s9, 2
      %s16 = sadd.s32 %s9, 1
      %s17 = ssub.s32 %s9, %s16
      %p18 = scmp.eq.s32.totalorder %s17, 0
      %s20 = sadd.s32 %s19, 1
      %s21 = scalar_select %p18, %s19, %s20
      %p24 = pneg %p18
      %p25 = scmp.eq.s32.totalorder %s9, 1
      %p26 = por %p24, %p25
      %p27 = scmp.ne.s32.totalorder %s19, %s22
      %p28 = scmp.eq.s32.totalorder %s9, 0
      %p29 = por %p27, %p28
      %p30 = scmp.ne.s32.totalorder %s19, %s22
      %p31 = scmp.eq.s32.totalorder %s14, 1
      %p32 = por %p30, %p31
      %p33 = scmp.ne.s32.totalorder %s22, %s23
      %p34 = scmp.eq.s32.totalorder %s14, 0
      %p35 = por %p33, %p34
      %p36 = scmp.ne.s32.totalorder %s22, %s23
      %p37 = scmp.eq.s32.totalorder %s15, 1
      %p38 = por %p36, %p37
      %p40 = scmp.ne.s32.totalorder %s23, %s39
      %p41 = scmp.eq.s32.totalorder %s15, 0
      %p42 = por %p40, %p41
      %s43 = ssub.s32 %s9, %s16
      %p44 = scmp.eq.s32.totalorder %s43, 0
      %s46 = sadd.s32 %s45, 1
      %s47 = scalar_select %p44, %s45, %s46
      %p50 = pneg %p44
      %p51 = scmp.eq.s32.totalorder %s9, 1
      %p52 = por %p50, %p51
      %p53 = scmp.ne.s32.totalorder %s45, %s48
      %p54 = scmp.eq.s32.totalorder %s9, 0
      %p55 = por %p53, %p54
      %p56 = scmp.ne.s32.totalorder %s45, %s48
      %p57 = scmp.eq.s32.totalorder %s14, 1
      %p58 = por %p56, %p57
      %p59 = scmp.ne.s32.totalorder %s48, %s49
      %p60 = scmp.eq.s32.totalorder %s14, 0
      %p61 = por %p59, %p60
      %p62 = scmp.ne.s32.totalorder %s48, %s49
      %p63 = scmp.eq.s32.totalorder %s15, 1
      %p64 = por %p62, %p63
      %p66 = scmp.ne.s32.totalorder %s49, %s65
      %p67 = scmp.eq.s32.totalorder %s15, 0
      %p68 = por %p66, %p67
      %s70 = sadd.s32 %s69, 1
      %p73 = scmp.eq.s32.totalorder %s9, 1
      %p74 = scmp.ne.s32.totalorder %s69, %s71
      %p75 = scmp.eq.s32.totalorder %s9, 0
      %p76 = por %p74, %p75
      %p77 = scmp.ne.s32.totalorder %s69, %s71
      %p78 = scmp.eq.s32.totalorder %s14, 1
      %p79 = por %p77, %p78
      %p80 = scmp.ne.s32.totalorder %s71, %s72
      %p81 = scmp.eq.s32.totalorder %s14, 0
      %p82 = por %p80, %p81
      %p83 = scmp.ne.s32.totalorder %s71, %s72
      %p84 = scmp.eq.s32.totalorder %s15, 1
      %p85 = por %p83, %p84
      %p87 = scmp.ne.s32.totalorder %s72, %s86
      %p88 = scmp.eq.s32.totalorder %s15, 0
      %p89 = por %p87, %p88
      %p90 = scmp.le.s32.totalorder 1, %s9
      %p91 = scmp.lt.s32.totalorder %s9, 3
      %p92 = pnand %p90, %p91
      %p93 = pneg %p92
      // Predicated region
      $region9: #{tpu_custom_call.1} parent=5 // pred_check
        _
      $region10: #{tpu_custom_call.1} parent=5 // pred_check_branch
        %95 = sbr.rel (%p92) target = $region12
      $region11: #{tpu_custom_call.1} parent=5 // pred_region
        %s96 = ssub.s32 %s9, 1
      $region12: #{tpu_custom_call.1} parent=5 // pred_fallthru
        _
      %p97 = scmp.lt.s32.totalorder %s9, 2
      // Predicated region
      $region13: #{tpu_custom_call.1} parent=5 // pred_check
        %p98 = pneg %p97
      $region14: #{tpu_custom_call.1} parent=5 // pred_check_branch
        %100 = sbr.rel (%p98) target = $region16
      $region15: #{tpu_custom_call.1} parent=5 // pred_region
        // Predicated region
        $region17: #{tpu_custom_call.1} parent=15 // pred_check
          %p101 = pneg %p29
        $region18: #{tpu_custom_call.1} parent=15 // pred_check_branch
          %103 = sbr.rel (%p101) target = $region20
        $region19: #{tpu_custom_call.1} parent=15 // pred_region
          %p104 = scmp.lt.s32.totalorder %s9, 1
          %s105 = scalar_select %p104, %s9, 1
          %s106 = smul.addr %s105, 8
          %s107 = scalar_lea.vmem %s0, %s106
        $region20: #{tpu_custom_call.1} parent=15 // pred_fallthru
          _
        // Predicated region
        $region21: #{tpu_custom_call.1} parent=15 // pred_check
          %p108 = pneg %p55
        $region22: #{tpu_custom_call.1} parent=15 // pred_check_branch
          %110 = sbr.rel (%p108) target = $region24
        $region23: #{tpu_custom_call.1} parent=15 // pred_region
          %p111 = scmp.lt.s32.totalorder %s9, 1
          %s112 = scalar_select %p111, %s9, 1
          %s113 = smul.addr %s112, 8
          %s114 = scalar_lea.vmem %s1, %s113
        $region24: #{tpu_custom_call.1} parent=15 // pred_fallthru
          _
      $region16: #{tpu_custom_call.1} parent=5 // pred_fallthru
        _
      %p115 = scmp.le.s32.totalorder 1, %s9
      %p116 = scmp.lt.s32.totalorder %s9, 3
      %p117 = pnand %p115, %p116
      %p118 = pneg %p117
      // Predicated region
      $region25: #{tpu_custom_call.1} parent=5 // pred_check
        _
      $region26: #{tpu_custom_call.1} parent=5 // pred_check_branch
        %120 = sbr.rel (%p117) target = $region28
      $region27: #{tpu_custom_call.1} parent=5 // pred_region
        %s121 = ssub.s32 %s9, 1
        %p122 = scmp.lt.s32.totalorder %s14, 1
        %s123 = scalar_select %p122, %s14, 1
        %s124 = smul.addr %s123, 8
        %s125 = scalar_lea.vmem %s0, %s124
        %p126 = pneg %p35
        %p127 = pneg %p32
        %p128 = scmp.lt.s32.totalorder %s14, 1
        %s129 = scalar_select %p128, %s14, 1
        %s130 = smul.addr %s129, 8
        %s131 = scalar_lea.vmem %s1, %s130
        %p132 = pneg %p61
        %p133 = pneg %p58
        %p134 = pneg %p82
        %p135 = pneg %p79
        %p136 = scmp.lt.s32.totalorder %s14, 1
        %s137 = scalar_select %p136, %s14, 1
        %s138 = smul.addr %s137, 8
        %s139 = scalar_lea.vmem %s0, %s138
        %p140 = scmp.lt.s32.totalorder %s14, 1
        %s141 = scalar_select %p140, %s14, 1
        %s142 = smul.addr %s141, 8
        %s143 = scalar_lea.vmem %s1, %s142
        %p144 = scmp.eq.s32.totalorder %s14, 0
        // Predicated region
        $region29: #{tpu_custom_call.1} parent=27 // pred_check
          %p145 = pneg %p144
        $region30: #{tpu_custom_call.1} parent=27 // pred_check_branch
          %147 = sbr.rel (%p145) target = $region32
        $region31: #{tpu_custom_call.1} parent=27 // pred_region
          %vm148 = vcmask 0
          %149 = vst.msk [vmem:[#allocation2] sm:$0x1] %vm148, 0.0
        $region32: #{tpu_custom_call.1} parent=27 // pred_fallthru
          _
        %v150 = vld [vmem:[%s139] sm:$0xff]
        %v151 = vld [vmem:[%s143] sm:$0xff]
        %vm152 = vcmask 261120
        %v153 = vsel %vm152, %v150, -inf
        %154 = vmax.xlane.f32.xlu0 %v153
        %v155 = vpop.xlane.xlu0 %154
        %v156 = vsub.f32 %v150, %v155
        %v157 = vmul.f32 %v156, 1.442695
        %v158 = vpow.pop %v157
        %v159 = vsel %vm152, %v158, 0.0
        %160 = vadd.xlane.f32.xlu0 %v159
        %v161 = vpop.xlane.xlu0 %160
        %v162 = vlaneseq
        %v163 = vand.u32 %v162, 127
        %164 = vset.pattern.permute.xlu0 0
        %165 = vperm.xlu0 %164, %v151
        %v166 = vpop.permute.xlu0 %165
        %vm167 = vcmp.eq.s32.totalorder %v163, %v166
        %v168 = vsel %vm167, %v156, 0.0
        %v169 = vsel %vm152, %v168, 0.0
        %170 = vadd.xlane.f32.xlu0 %v169
        %v171 = vpop.xlane.xlu0 %170
        %v172 = vlog2.pop %v161
        %v173 = vmul.f32 %v172, 0.6931472
        %v174 = vsub.f32 %v173, %v171
        %s175 = smul.u32 %s14, 8
        %v176 = vlaneseq
        %v177 = vshrl.u32 %v176, 7
        %v178 = vstv %s175
        %v179 = vadd.s32 %v178, %v177
        %vm180 = vcmp.lt.s32.totalorder %v179, 12
        %v181 = vsel %vm180, %v174, 0.0
        %v182 = vld [vmem:[#allocation2] sm:$0x1]
        %v183 = vrot.slane %v181, 4
        %v184 = vadd.f32 %v181, %v183
        %v185 = vrot.slane %v184, 2
        %v186 = vadd.f32 %v184, %v185
        %v187 = vrot.slane %v186, 1
        %v188 = vadd.f32 %v186, %v187
        %v189 = vadd.f32 %v182, %v188
        %vm190 = vcmask 0
        %191 = vst.msk [vmem:[#allocation2] sm:$0x1] %vm190, %v189
        %p192 = scmp.eq.s32.totalorder %s14, 1
        // Predicated region
        $region33: #{tpu_custom_call.1} parent=27 // pred_check
          %p193 = pneg %p192
        $region34: #{tpu_custom_call.1} parent=27 // pred_check_branch
          %195 = sbr.rel (%p193) target = $region36
        $region35: #{tpu_custom_call.1} parent=27 // pred_region
          %v196 = vld [vmem:[#allocation2] sm:$0x1]
          %v197 = vmul.f32 %v196, 0.083333336
          %v198 = vsub.f32 0.0, %v197
          %v199 = vmul.f32 %v198, 1.442695
          %v200 = vpow.pop %v199
          %v201 = vsub.f32 1.0, %v200
          %v202 = vmul.f32 %v201, %v201
          %v203 = vmul.f32 %v202, 0.25
          %v204 = vmul.f32 %v203, %v197
          %205 = vst.msk [vmem:[#allocation3] sm:$0x1] %vm190, %v204
        $region36: #{tpu_custom_call.1} parent=27 // pred_fallthru
          _
        // Predicated region
        $region37: #{tpu_custom_call.1} parent=27 // pred_check
          %p206 = pneg %p79
        $region38: #{tpu_custom_call.1} parent=27 // pred_check_branch
          %208 = sbr.rel (%p206) target = $region40
        $region39: #{tpu_custom_call.1} parent=27 // pred_region
          %s210 = ssub.s32 16, 16
          %211 = vsyncadd [#allocation4], %s210
          %s213 = sshll.u32 [#allocation3], 4
          %s214 = int_to_ptr.vmem [resolvable:$true] %s213
          %216 = dma.vmem_to_hbm [thread:$0]  %s214, 16, %s2, [#allocation4]
        $region40: #{tpu_custom_call.1} parent=27 // pred_fallthru
          _
        // Predicated region
        $region41: #{tpu_custom_call.1} parent=27 // pred_check
          %p217 = pneg %p79
        $region42: #{tpu_custom_call.1} parent=27 // pred_check_branch
          %219 = sbr.rel (%p217) target = $region44
        $region43: #{tpu_custom_call.1} parent=27 // pred_region
          %220 = dma.done [#allocation4], 16
        $region44: #{tpu_custom_call.1} parent=27 // pred_fallthru
          _
      $region28: #{tpu_custom_call.1} parent=5 // pred_fallthru
        _
      %p221 = scmp.le.s32.totalorder 2, %s9
      // Predicated region
      $region45: #{tpu_custom_call.1} parent=5 // pred_check
        %p222 = pneg %p221
      $region46: #{tpu_custom_call.1} parent=5 // pred_check_branch
        %224 = sbr.rel (%p222) target = $region48
      $region47: #{tpu_custom_call.1} parent=5 // pred_region
        %s225 = ssub.s32 %s9, 2
      $region48: #{tpu_custom_call.1} parent=5 // pred_fallthru
        _
    $region6: #{tpu_custom_call.1} parent=1 // loop_footer
      %s13 = sadd.s32 1, %s9
    $region7: #{tpu_custom_call.1} parent=1 // loop_footer_branch
      %8 = sbr.rel target = $region3
    $region8: #{tpu_custom_call.1} parent=1 // loop_exit
      _
    %226 = vsyncpa [#allocation4], 1
    %s227 = scalar_lea.sflag [#allocation4], 1
    %228 = vsyncpa %s227, 1

</llo_original>
